<compile_context>
chip_gen: v5e
topology: v5e:2x2
jax: 0.10.0
libtpu: 0.0.40
codegen_flags: <defaults>
</compile_context>

<pallas_src>
import jax
import jax.numpy as jnp
from jax.experimental import pallas as pl
from jax.experimental.pallas import tpu as pltpu

IN_FEATURES = 28 * 28    # 784 (unpadded: block last dim == full array dim)
OUT_FEATURES = 10
N_PAD = 128              # lane-dense output / weight width (unmasked vst, MXU tile)
TM_MAX = 2048            # batch tile rows: 2048*784*4B ~= 6.1 MiB per x buffer


def _round_up(x, m):
    return (x + m - 1) // m * m


def _cdiv(a, b):
    return (a + b - 1) // b


def linear_kernel(x_ref, w_ref, b_ref, o_ref):
    # x_ref: (tm, 784), w_ref: (784, N_PAD), b_ref: (1, N_PAD), o_ref: (tm, N_PAD)
    acc = jnp.dot(x_ref[...], w_ref[...], preferred_element_type=jnp.float32)
    o_ref[...] = (acc + b_ref[...]).astype(o_ref.dtype)


def prepare_params(w, b):
    """One-time prep (call at init, NOT per forward): pad W (784,10)->(784,128)
    and bias (10,)->(1,128) so the kernel sees lane-dense tiles."""
    w_p = (jnp.zeros((IN_FEATURES, N_PAD), jnp.float32)
           .at[:, :OUT_FEATURES].set(w.astype(jnp.float32)))
    b_p = (jnp.zeros((1, N_PAD), jnp.float32)
           .at[0, :OUT_FEATURES].set(b.astype(jnp.float32)))
    return w_p, b_p


def simple_nn_forward(x, w_p, b_p):
    """x: any shape with 784 trailing elements (e.g. (B, 1, 28, 28) NCHW).
    w_p, b_p: pre-padded parameters from prepare_params()."""
    x2d = x.reshape(-1, IN_FEATURES).astype(jnp.float32)   # == torch .view(-1, 784)
    batch = x2d.shape[0]

    # Batch tile: multiple of 8 sublanes, capped at TM_MAX, split so the grid
    # has >= 2 steps for non-trivial batches (both TensorCores busy on v7x).
    tm = max(8, min(TM_MAX, _round_up(_cdiv(batch, 2), 8)))
    grid = _cdiv(batch, tm)

    cost = pl.CostEstimate(
        flops=2 * batch * IN_FEATURES * OUT_FEATURES,       # true work (N=10)
        transcendentals=0,
        bytes_accessed=(batch * IN_FEATURES                 # x read
                        + IN_FEATURES * N_PAD               # W read (VMEM-resident)
                        + batch * N_PAD) * 4,               # out write
    )

    out = pl.pallas_call(
        linear_kernel,
        out_shape=jax.ShapeDtypeStruct((batch, N_PAD), jnp.float32),
        grid_spec=pltpu.PrefetchScalarGridSpec(
            num_scalar_prefetch=0,
            grid=(grid,),
            in_specs=[
                pl.BlockSpec((tm, IN_FEATURES), lambda i: (i, 0)),     # x tile (pipelined)
                pl.BlockSpec((IN_FEATURES, N_PAD), lambda i: (0, 0)),  # W (resident)
                pl.BlockSpec((1, N_PAD), lambda i: (0, 0)),            # bias (resident)
            ],
            out_specs=pl.BlockSpec((tm, N_PAD), lambda i: (i, 0)),
        ),
        compiler_params=pltpu.CompilerParams(
            dimension_semantics=("parallel",),   # shard batch tiles across TCs on v7x
            vmem_limit_bytes=48 << 20,           # fits 2048-row double buffers on v5e too
        ),
        cost_estimate=cost,
    )(x2d, w_p, b_p)

    # Drop the zero-padded output lanes; rows are exact (out_shape rows == batch).
    return out[:, :OUT_FEATURES]


def init_params(key):
    # Mimic nn.Linear default init: U(-1/sqrt(fan_in), 1/sqrt(fan_in)).
    # Weight kept transposed as (784, 10) so the kernel computes x @ W + b.
    kw, kb = jax.random.split(key)
    bound = 1.0 / jnp.sqrt(jnp.float32(IN_FEATURES))
    w = jax.random.uniform(kw, (IN_FEATURES, OUT_FEATURES), jnp.float32, -bound, bound)
    b = jax.random.uniform(kb, (OUT_FEATURES,), jnp.float32, -bound, bound)
    return w, b


if __name__ == "__main__":
    key = jax.random.PRNGKey(0)
    kx, kp = jax.random.split(key)

    # Small MNIST-like batch: (B=2, C=1, H=28, W=28), NCHW like PyTorch.
    x = jax.random.normal(kx, (2, 1, 28, 28), jnp.float32)
    w, b = init_params(kp)
    w_p, b_p = prepare_params(w, b)          # one-time param prep (hoisted out of forward)

    out = simple_nn_forward(x, w_p, b_p)
    jax.block_until_ready(out)

    # Cross-check against plain JAX reference.
    ref = x.reshape(-1, IN_FEATURES) @ w + b[None, :]
    assert out.shape == (2, OUT_FEATURES)
    assert jnp.allclose(out, ref, atol=1e-5, rtol=1e-5)

    print("KERNEL_OK")
</pallas_src>

<mosaic_0001>
module attributes {stable_mosaic.version = 11 : i64} {
  func.func @linear_kernel(%arg0: i32, %arg1: memref<8x784xf32, #tpu.memory_space<vmem>>, %arg2: memref<784x128xf32, #tpu.memory_space<vmem>>, %arg3: memref<1x128xf32, #tpu.memory_space<vmem>>, %arg4: memref<8x128xf32, #tpu.memory_space<vmem>>) attributes {dimension_semantics = [#tpu.dimension_semantics<parallel>], iteration_bounds = array<i64: 1>, scalar_prefetch = 0 : i64, scratch_operands = 0 : i64, tpu.core_type = #tpu.core_type<tc>, window_params = [{transform_indices = @transform_0, window_bounds = array<i64: 8, 784>}, {pipeline_mode = #tpu.pipeline_mode<synchronous>, transform_indices = @transform_1, window_bounds = array<i64: 784, 128>}, {pipeline_mode = #tpu.pipeline_mode<synchronous>, transform_indices = @transform_2, window_bounds = array<i64: 1, 128>}, {transform_indices = @transform_3, window_bounds = array<i64: 8, 128>}]} {
    %c0 = arith.constant 0 : index
    %c0_0 = arith.constant 0 : index
    %0 = vector.load %arg1[%c0, %c0_0] : memref<8x784xf32, #tpu.memory_space<vmem>>, vector<8x784xf32>
    %c0_1 = arith.constant 0 : index
    %c0_2 = arith.constant 0 : index
    %1 = vector.load %arg2[%c0_1, %c0_2] : memref<784x128xf32, #tpu.memory_space<vmem>>, vector<784x128xf32>
    %cst = arith.constant dense<0.000000e+00> : vector<8x128xf32>
    %2 = tpu.matmul %0, %1, %cst {dimension_numbers = #tpu.dot_dimension_numbers<[1], [0], [0], [1], [0, 0, 1, 1], [], []>} : vector<8x784xf32>, vector<784x128xf32>, vector<8x128xf32> -> vector<8x128xf32>
    %c0_3 = arith.constant 0 : index
    %c0_4 = arith.constant 0 : index
    %3 = vector.load %arg3[%c0_3, %c0_4] : memref<1x128xf32, #tpu.memory_space<vmem>>, vector<1x128xf32>
    %4 = vector.broadcast %3 : vector<1x128xf32> to vector<8x128xf32>
    %5 = arith.addf %2, %4 : vector<8x128xf32>
    %c0_5 = arith.constant 0 : index
    %c0_6 = arith.constant 0 : index
    %6 = vector.load %arg4[%c0_5, %c0_6] : memref<8x128xf32, #tpu.memory_space<vmem>>, vector<8x128xf32>
    tpu.vector_store %arg4[%c0_5, %c0_6], %5 {strides = array<i32>} : memref<8x128xf32, #tpu.memory_space<vmem>>, vector<8x128xf32>,
    return
  }
  func.func @transform_0(%arg0: i32) -> (i32, i32) {
    %c0_i32 = arith.constant 0 : i32
    %c0_i32_0 = arith.constant 0 : i32
    return %arg0, %c0_i32 : i32, i32
  }
  func.func @transform_1(%arg0: i32) -> (i32, i32) {
    %c0_i32 = arith.constant 0 : i32
    %c0_i32_0 = arith.constant 0 : i32
    %c0_i32_1 = arith.constant 0 : i32
    return %c0_i32, %c0_i32_0 : i32, i32
  }
  func.func @transform_2(%arg0: i32) -> (i32, i32) {
    %c0_i32 = arith.constant 0 : i32
    %c0_i32_0 = arith.constant 0 : i32
    %c0_i32_1 = arith.constant 0 : i32
    return %c0_i32, %c0_i32_0 : i32, i32
  }
  func.func @transform_3(%arg0: i32) -> (i32, i32) {
    %c0_i32 = arith.constant 0 : i32
    %c0_i32_0 = arith.constant 0 : i32
    return %arg0, %c0_i32 : i32, i32
  }
}

</mosaic_0001>

<llo_original>
// kernel: tpu_custom_call.1
$region0: #{tpu_custom_call.1}
  #allocation0 [shape = 'u32[]', space=smem, size = 0x4, offset = 0x4, fixed_abs, tag = 'smem constant byte address 0x4 - core index']
  #allocation1 [shape = 'u32[72,128]{1,0:T(1,128)}', space=vmem, size = 0x9000, scoped, tag = 'internal scratch']
  %s0 = inlined_call_operand.hbm [shape: f32[2,784], index: 0, kind: input, shape index: {}]
  %s1 = inlined_call_operand.hbm [shape: f32[784,128], index: 1, kind: input, shape index: {}]
  %s2 = inlined_call_operand.vmem [shape: f32[1,128], index: 2, kind: input, shape index: {}]
  %s3 = inlined_call_operand.hbm [shape: f32[2,128], index: 3, kind: output, shape index: {}]
  %s4 = sld [smem:[#allocation0]]
  $region30: #{tpu_custom_call.1} parent=0
    _
  %s6 = ssub.s32 1, %s4
  %s7 = scalar_select 0, %s6, %s4
  $region1: #{tpu_custom_call.1} parent=0
    #allocation2 [shape = 'u8[28672]{0}', space=vmem, size = 0x7000, scoped, tag = 'input window, operand 0, single buffered']
    #allocation3 [shape = 's32[1]{0}', space=sflag, size = 0x4, scoped, tag = 'scoped memory for tpu_custom_call.1']
    #allocation4 [shape = 's32[1]{0}', space=sflag, size = 0x4, scoped, tag = 'scoped memory for tpu_custom_call.1']
    #allocation5 [shape = 'u8[401408]{0}', space=vmem, size = 0x62000, scoped, tag = 'input window, operand 1, single buffered']
    #allocation6 [shape = 's32[1]{0}', space=sflag, size = 0x4, scoped, tag = 'scoped memory for tpu_custom_call.1']
    #allocation7 [shape = 'u8[4096]{0}', space=vmem, size = 0x1000, scoped, tag = 'output window, operand 0, single buffered']
    %8 = vsyncpa [#allocation3], 0
    %9 = vsyncpa [#allocation6], 0
    %10 = vsyncpa [#allocation4], 0
    // Predicated region
    $region2: #{tpu_custom_call.1} parent=1 // pred_check
      _
    $region3: #{tpu_custom_call.1} parent=1 // pred_check_branch
      %12 = sbr.rel (0) target = $region5
    $region4: #{tpu_custom_call.1} parent=1 // pred_region
      %14 = vsyncadd [#allocation3], 672
      %s15 = sshll.u32 %s0, 4
      %s16 = int_to_ptr.hbm [resolvable:$true] %s15
      %s17 = sshll.u32 [#allocation2], 4
      %s18 = int_to_ptr.vmem [resolvable:$true] %s17
      %23 = dma.hbm_to_vmem [thread:$0]  %s16, 224, %s18, [#allocation3], 224, 224, 14
    $region5: #{tpu_custom_call.1} parent=1 // pred_fallthru
      _
    // Predicated region
    $region6: #{tpu_custom_call.1} parent=1 // pred_check
      _
    $region7: #{tpu_custom_call.1} parent=1 // pred_check_branch
      %25 = sbr.rel (0) target = $region9
    $region8: #{tpu_custom_call.1} parent=1 // pred_region
      %27 = vsyncadd [#allocation6], 0
      %s28 = sshll.u32 %s1, 4
      %s29 = int_to_ptr.hbm [resolvable:$true] %s28
      %s30 = sshll.u32 [#allocation5], 4
      %s31 = int_to_ptr.vmem [resolvable:$true] %s30
      %36 = dma.hbm_to_vmem [thread:$0]  %s29, 12544, %s31, [#allocation6], 128, 128, 8
    $region9: #{tpu_custom_call.1} parent=1 // pred_fallthru
      _
    // Predicated region
    $region10: #{tpu_custom_call.1} parent=1 // pred_check
      _
    $region11: #{tpu_custom_call.1} parent=1 // pred_check_branch
      %38 = sbr.rel (0) target = $region13
    $region12: #{tpu_custom_call.1} parent=1 // pred_region
      _
    $region13: #{tpu_custom_call.1} parent=1 // pred_fallthru
      _
    // Predicated region
    $region14: #{tpu_custom_call.1} parent=1 // pred_check
      _
    $region15: #{tpu_custom_call.1} parent=1 // pred_check_branch
      %40 = sbr.rel (0) target = $region17
    $region16: #{tpu_custom_call.1} parent=1 // pred_region
      %42 = dma.done [#allocation3], 896
    $region17: #{tpu_custom_call.1} parent=1 // pred_fallthru
      _
    // Predicated region
    $region18: #{tpu_custom_call.1} parent=1 // pred_check
      _
    $region19: #{tpu_custom_call.1} parent=1 // pred_check_branch
      %44 = sbr.rel (0) target = $region21
    $region20: #{tpu_custom_call.1} parent=1 // pred_region
      %46 = dma.done [#allocation6], 12544
    $region21: #{tpu_custom_call.1} parent=1 // pred_fallthru
      _
    %v47 = vld [vmem:[#allocation2] sm:$0xff]
    %v48 = vld [vmem:[#allocation2 + $0x8] sm:$0x3f]
    %v49 = vld [vmem:[#allocation2 + $0xe] sm:$0xff]
    %v50 = vld [vmem:[#allocation2 + $0x16] sm:$0x3f]
    %v51 = vld [vmem:[#allocation2 + $0x1c] sm:$0xff]
    %v52 = vld [vmem:[#allocation2 + $0x24] sm:$0x3f]
    %v53 = vld [vmem:[#allocation2 + $0x2a] sm:$0xff]
    %v54 = vld [vmem:[#allocation2 + $0x32] sm:$0x3f]
    %v55 = vld [vmem:[#allocation5] sm:$0xff]
    %v56 = vld [vmem:[#allocation5 + $0x8] sm:$0xff]
    %v57 = vld [vmem:[#allocation5 + $0x10] sm:$0xff]
    %v58 = vld [vmem:[#allocation5 + $0x18] sm:$0xff]
    %v59 = vld [vmem:[#allocation5 + $0x20] sm:$0xff]
    %v60 = vld [vmem:[#allocation5 + $0x28] sm:$0xff]
    %v61 = vld [vmem:[#allocation5 + $0x30] sm:$0xff]
    %v62 = vld [vmem:[#allocation5 + $0x38] sm:$0xff]
    %v63 = vld [vmem:[#allocation5 + $0x40] sm:$0xff]
    %v64 = vld [vmem:[#allocation5 + $0x48] sm:$0xff]
    %v65 = vld [vmem:[#allocation5 + $0x50] sm:$0xff]
    %v66 = vld [vmem:[#allocation5 + $0x58] sm:$0xff]
    %v67 = vld [vmem:[#allocation5 + $0x60] sm:$0xff]
    %v68 = vld [vmem:[#allocation5 + $0x68] sm:$0xff]
    %v69 = vld [vmem:[#allocation5 + $0x70] sm:$0xff]
    %v70 = vld [vmem:[#allocation5 + $0x78] sm:$0xff]
    %v71 = vld [vmem:[#allocation5 + $0x80] sm:$0xff]
    %v72 = vld [vmem:[#allocation5 + $0x88] sm:$0xff]
    %v73 = vld [vmem:[#allocation5 + $0x90] sm:$0xff]
    %v74 = vld [vmem:[#allocation5 + $0x98] sm:$0xff]
    %v75 = vld [vmem:[#allocation5 + $0xa0] sm:$0xff]
    %v76 = vld [vmem:[#allocation5 + $0xa8] sm:$0xff]
    %v77 = vld [vmem:[#allocation5 + $0xb0] sm:$0xff]
    %v78 = vld [vmem:[#allocation5 + $0xb8] sm:$0xff]
    %v79 = vld [vmem:[#allocation5 + $0xc0] sm:$0xff]
    %v80 = vld [vmem:[#allocation5 + $0xc8] sm:$0xff]
    %v81 = vld [vmem:[#allocation5 + $0xd0] sm:$0xff]
    %v82 = vld [vmem:[#allocation5 + $0xd8] sm:$0xff]
    %v83 = vld [vmem:[#allocation5 + $0xe0] sm:$0xff]
    %v84 = vld [vmem:[#allocation5 + $0xe8] sm:$0xff]
    %v85 = vld [vmem:[#allocation5 + $0xf0] sm:$0xff]
    %v86 = vld [vmem:[#allocation5 + $0xf8] sm:$0xff]
    %v87 = vld [vmem:[#allocation5 + $0x100] sm:$0xff]
    %v88 = vld [vmem:[#allocation5 + $0x108] sm:$0xff]
    %v89 = vld [vmem:[#allocation5 + $0x110] sm:$0xff]
    %v90 = vld [vmem:[#allocation5 + $0x118] sm:$0xff]
    %v91 = vld [vmem:[#allocation5 + $0x120] sm:$0xff]
    %v92 = vld [vmem:[#allocation5 + $0x128] sm:$0xff]
    %v93 = vld [vmem:[#allocation5 + $0x130] sm:$0xff]
    %v94 = vld [vmem:[#allocation5 + $0x138] sm:$0xff]
    %v95 = vld [vmem:[#allocation5 + $0x140] sm:$0xff]
    %v96 = vld [vmem:[#allocation5 + $0x148] sm:$0xff]
    %v97 = vld [vmem:[#allocation5 + $0x150] sm:$0xff]
    %v98 = vld [vmem:[#allocation5 + $0x158] sm:$0xff]
    %v99 = vld [vmem:[#allocation5 + $0x160] sm:$0xff]
    %v100 = vld [vmem:[#allocation5 + $0x168] sm:$0xff]
    %v101 = vld [vmem:[#allocation5 + $0x170] sm:$0xff]
    %v102 = vld [vmem:[#allocation5 + $0x178] sm:$0xff]
    %v103 = vld [vmem:[#allocation5 + $0x180] sm:$0xff]
    %v104 = vld [vmem:[#allocation5 + $0x188] sm:$0xff]
    %v105 = vld [vmem:[#allocation5 + $0x190] sm:$0xff]
    %v106 = vld [vmem:[#allocation5 + $0x198] sm:$0xff]
    %v107 = vld [vmem:[#allocation5 + $0x1a0] sm:$0xff]
    %v108 = vld [vmem:[#allocation5 + $0x1a8] sm:$0xff]
    %v109 = vld [vmem:[#allocation5 + $0x1b0] sm:$0xff]
    %v110 = vld [vmem:[#allocation5 + $0x1b8] sm:$0xff]
    %v111 = vld [vmem:[#allocation5 + $0x1c0] sm:$0xff]
    %v112 = vld [vmem:[#allocation5 + $0x1c8] sm:$0xff]
    %v113 = vld [vmem:[#allocation5 + $0x1d0] sm:$0xff]
    %v114 = vld [vmem:[#allocation5 + $0x1d8] sm:$0xff]
    %v115 = vld [vmem:[#allocation5 + $0x1e0] sm:$0xff]
    %v116 = vld [vmem:[#allocation5 + $0x1e8] sm:$0xff]
    %v117 = vld [vmem:[#allocation5 + $0x1f0] sm:$0xff]
    %v118 = vld [vmem:[#allocation5 + $0x1f8] sm:$0xff]
    %v119 = vld [vmem:[#allocation5 + $0x200] sm:$0xff]
    %v120 = vld [vmem:[#allocation5 + $0x208] sm:$0xff]
    %v121 = vld [vmem:[#allocation5 + $0x210] sm:$0xff]
    %v122 = vld [vmem:[#allocation5 + $0x218] sm:$0xff]
    %v123 = vld [vmem:[#allocation5 + $0x220] sm:$0xff]
    %v124 = vld [vmem:[#allocation5 + $0x228] sm:$0xff]
    %v125 = vld [vmem:[#allocation5 + $0x230] sm:$0xff]
    %v126 = vld [vmem:[#allocation5 + $0x238] sm:$0xff]
    %v127 = vld [vmem:[#allocation5 + $0x240] sm:$0xff]
    %v128 = vld [vmem:[#allocation5 + $0x248] sm:$0xff]
    %v129 = vld [vmem:[#allocation5 + $0x250] sm:$0xff]
    %v130 = vld [vmem:[#allocation5 + $0x258] sm:$0xff]
    %v131 = vld [vmem:[#allocation5 + $0x260] sm:$0xff]
    %v132 = vld [vmem:[#allocation5 + $0x268] sm:$0xff]
    %v133 = vld [vmem:[#allocation5 + $0x270] sm:$0xff]
    %v134 = vld [vmem:[#allocation5 + $0x278] sm:$0xff]
    %v135 = vld [vmem:[#allocation5 + $0x280] sm:$0xff]
    %v136 = vld [vmem:[#allocation5 + $0x288] sm:$0xff]
    %v137 = vld [vmem:[#allocation5 + $0x290] sm:$0xff]
    %v138 = vld [vmem:[#allocation5 + $0x298] sm:$0xff]
    %v139 = vld [vmem:[#allocation5 + $0x2a0] sm:$0xff]
    %v140 = vld [vmem:[#allocation5 + $0x2a8] sm:$0xff]
    %v141 = vld [vmem:[#allocation5 + $0x2b0] sm:$0xff]
    %v142 = vld [vmem:[#allocation5 + $0x2b8] sm:$0xff]
    %v143 = vld [vmem:[#allocation5 + $0x2c0] sm:$0xff]
    %v144 = vld [vmem:[#allocation5 + $0x2c8] sm:$0xff]
    %v145 = vld [vmem:[#allocation5 + $0x2d0] sm:$0xff]
    %v146 = vld [vmem:[#allocation5 + $0x2d8] sm:$0xff]
    %v147 = vld [vmem:[#allocation5 + $0x2e0] sm:$0xff]
    %v148 = vld [vmem:[#allocation5 + $0x2e8] sm:$0xff]
    %v149 = vld [vmem:[#allocation5 + $0x2f0] sm:$0xff]
    %v150 = vld [vmem:[#allocation5 + $0x2f8] sm:$0xff]
    %v151 = vld [vmem:[#allocation5 + $0x300] sm:$0xff]
    %v152 = vld [vmem:[#allocation5 + $0x308] sm:$0xff]
    %v153 = vld [vmem:[%s2] sm:$0x1]
    %v155 = vperm.slane %v153, 0
    %165 = vst [vmem:[#allocation1] ss:$4 sm:$0xff] %v47
    %s166 = scalar_lea.vmem [#allocation1], 1
    %167 = vst [vmem:[%s166] ss:$4 sm:$0xff] %v49
    %s168 = scalar_lea.vmem [#allocation1], 2
    %169 = vst [vmem:[%s168] ss:$4 sm:$0xff] %v51
    %s170 = scalar_lea.vmem [#allocation1], 3
    %171 = vst [vmem:[%s170] ss:$4 sm:$0xff] %v53
    %s172 = scalar_lea.vmem [#allocation1], 32
    %173 = vst [vmem:[%s172] ss:$4 sm:$0xff] %v48
    %s174 = scalar_lea.vmem [#allocation1], 33
    %175 = vst [vmem:[%s174] ss:$4 sm:$0xff] %v50
    %s176 = scalar_lea.vmem [#allocation1], 34
    %177 = vst [vmem:[%s176] ss:$4 sm:$0xff] %v52
    %s178 = scalar_lea.vmem [#allocation1], 35
    %179 = vst [vmem:[%s178] ss:$4 sm:$0xff] %v54
    %v180 = vld.sshfl [vmem:[#allocation1] sm:$0xff pattern:$0x73625140]
    %v181 = vld.sshfl [vmem:[#allocation1 + $0x8] sm:$0xff pattern:$0x73625140]
    %v182 = vld.sshfl [vmem:[#allocation1 + $0x10] sm:$0xff pattern:$0x73625140]
    %v183 = vld.sshfl [vmem:[#allocation1 + $0x18] sm:$0xff pattern:$0x73625140]
    %v184 = vld.sshfl [vmem:[#allocation1 + $0x20] sm:$0xff pattern:$0x73625140]
    %v185 = vld.sshfl [vmem:[#allocation1 + $0x28] sm:$0xff pattern:$0x73625140]
    %v186 = vld.sshfl [vmem:[#allocation1 + $0x30] sm:$0xff pattern:$0x73625140]
    %vm193 = vcmask 130048
    %v194 = vsel %vm193, %v186, 0
    %196 = vmatpush.msra.mxu0 %v70
    %197 = vmatpush.msra.mxu0 %v69
    %198 = vmatpush.msra.mxu0 %v68
    %199 = vmatpush.msra.mxu0 %v67
    %200 = vmatpush.msra.mxu0 %v66
    %201 = vmatpush.msra.mxu0 %v65
    %202 = vmatpush.msra.mxu0 %v64
    %203 = vmatpush.msra.mxu0 %v63
    %204 = vmatpush.msra.mxu0 %v62
    %205 = vmatpush.msra.mxu0 %v61
    %206 = vmatpush.msra.mxu0 %v60
    %207 = vmatpush.msra.mxu0 %v59
    %208 = vmatpush.msra.mxu0 %v58
    %209 = vmatpush.msra.mxu0 %v57
    %210 = vmatpush.msra.mxu0 %v56
    %211 = vmatpush.msra.mxu0 %v55
    %212 = vmatmul.f32.gmra.mxu0 %v180
    %v213 = vpop.f32.mrf.mxu0
    %v214 = vadd.f32 %v155, %v213
    %215 = vdwg.mxu0
    %216 = vmatpush.msra.mxu0 %v86
    %217 = vmatpush.msra.mxu0 %v85
    %218 = vmatpush.msra.mxu0 %v84
    %219 = vmatpush.msra.mxu0 %v83
    %220 = vmatpush.msra.mxu0 %v82
    %221 = vmatpush.msra.mxu0 %v81
    %222 = vmatpush.msra.mxu0 %v80
    %223 = vmatpush.msra.mxu0 %v79
    %224 = vmatpush.msra.mxu0 %v78
    %225 = vmatpush.msra.mxu0 %v77
    %226 = vmatpush.msra.mxu0 %v76
    %227 = vmatpush.msra.mxu0 %v75
    %228 = vmatpush.msra.mxu0 %v74
    %229 = vmatpush.msra.mxu0 %v73
    %230 = vmatpush.msra.mxu0 %v72
    %231 = vmatpush.msra.mxu0 %v71
    %232 = vmatmul.f32.gmra.mxu0 %v181
    %v233 = vpop.f32.mrf.mxu0
    %v234 = vadd.f32 %v214, %v233
    %235 = vdwg.mxu0
    %236 = vmatpush.msra.mxu0 %v102
    %237 = vmatpush.msra.mxu0 %v101
    %238 = vmatpush.msra.mxu0 %v100
    %239 = vmatpush.msra.mxu0 %v99
    %240 = vmatpush.msra.mxu0 %v98
    %241 = vmatpush.msra.mxu0 %v97
    %242 = vmatpush.msra.mxu0 %v96
    %243 = vmatpush.msra.mxu0 %v95
    %244 = vmatpush.msra.mxu0 %v94
    %245 = vmatpush.msra.mxu0 %v93
    %246 = vmatpush.msra.mxu0 %v92
    %247 = vmatpush.msra.mxu0 %v91
    %248 = vmatpush.msra.mxu0 %v90
    %249 = vmatpush.msra.mxu0 %v89
    %250 = vmatpush.msra.mxu0 %v88
    %251 = vmatpush.msra.mxu0 %v87
    %252 = vmatmul.f32.gmra.mxu0 %v182
    %v253 = vpop.f32.mrf.mxu0
    %v254 = vadd.f32 %v234, %v253
    %255 = vdwg.mxu0
    %256 = vmatpush.msra.mxu0 %v118
    %257 = vmatpush.msra.mxu0 %v117
    %258 = vmatpush.msra.mxu0 %v116
    %259 = vmatpush.msra.mxu0 %v115
    %260 = vmatpush.msra.mxu0 %v114
    %261 = vmatpush.msra.mxu0 %v113
    %262 = vmatpush.msra.mxu0 %v112
    %263 = vmatpush.msra.mxu0 %v111
    %264 = vmatpush.msra.mxu0 %v110
    %265 = vmatpush.msra.mxu0 %v109
    %266 = vmatpush.msra.mxu0 %v108
    %267 = vmatpush.msra.mxu0 %v107
    %268 = vmatpush.msra.mxu0 %v106
    %269 = vmatpush.msra.mxu0 %v105
    %270 = vmatpush.msra.mxu0 %v104
    %271 = vmatpush.msra.mxu0 %v103
    %272 = vmatmul.f32.gmra.mxu0 %v183
    %v273 = vpop.f32.mrf.mxu0
    %v274 = vadd.f32 %v254, %v273
    %275 = vdwg.mxu0
    %276 = vmatpush.msra.mxu0 %v134
    %277 = vmatpush.msra.mxu0 %v133
    %278 = vmatpush.msra.mxu0 %v132
    %279 = vmatpush.msra.mxu0 %v131
    %280 = vmatpush.msra.mxu0 %v130
    %281 = vmatpush.msra.mxu0 %v129
    %282 = vmatpush.msra.mxu0 %v128
    %283 = vmatpush.msra.mxu0 %v127
    %284 = vmatpush.msra.mxu0 %v126
    %285 = vmatpush.msra.mxu0 %v125
    %286 = vmatpush.msra.mxu0 %v124
    %287 = vmatpush.msra.mxu0 %v123
    %288 = vmatpush.msra.mxu0 %v122
    %289 = vmatpush.msra.mxu0 %v121
    %290 = vmatpush.msra.mxu0 %v120
    %291 = vmatpush.msra.mxu0 %v119
    %292 = vmatmul.f32.gmra.mxu0 %v184
    %v293 = vpop.f32.mrf.mxu0
    %v294 = vadd.f32 %v274, %v293
    %295 = vdwg.mxu0
    %296 = vmatpush.msra.mxu0 %v150
    %297 = vmatpush.msra.mxu0 %v149
    %298 = vmatpush.msra.mxu0 %v148
    %299 = vmatpush.msra.mxu0 %v147
    %300 = vmatpush.msra.mxu0 %v146
    %301 = vmatpush.msra.mxu0 %v145
    %302 = vmatpush.msra.mxu0 %v144
    %303 = vmatpush.msra.mxu0 %v143
    %304 = vmatpush.msra.mxu0 %v142
    %305 = vmatpush.msra.mxu0 %v141
    %306 = vmatpush.msra.mxu0 %v140
    %307 = vmatpush.msra.mxu0 %v139
    %308 = vmatpush.msra.mxu0 %v138
    %309 = vmatpush.msra.mxu0 %v137
    %310 = vmatpush.msra.mxu0 %v136
    %311 = vmatpush.msra.mxu0 %v135
    %312 = vmatmul.f32.gmra.mxu0 %v185
    %v313 = vpop.f32.mrf.mxu0
    %v314 = vadd.f32 %v294, %v313
    %315 = vdwg.mxu0
    %316 = vmatpush.msra.mxu0 0.0
    %317 = vmatpush.msra.mxu0 0.0
    %318 = vmatpush.msra.mxu0 0.0
    %319 = vmatpush.msra.mxu0 0.0
    %320 = vmatpush.msra.mxu0 0.0
    %321 = vmatpush.msra.mxu0 0.0
    %322 = vmatpush.msra.mxu0 0.0
    %323 = vmatpush.msra.mxu0 0.0
    %324 = vmatpush.msra.mxu0 0.0
    %325 = vmatpush.msra.mxu0 0.0
    %326 = vmatpush.msra.mxu0 0.0
    %327 = vmatpush.msra.mxu0 0.0
    %328 = vmatpush.msra.mxu0 0.0
    %329 = vmatpush.msra.mxu0 0.0
    %330 = vmatpush.msra.mxu0 %v152
    %331 = vmatpush.msra.mxu0 %v151
    %332 = vmatmul.f32.gmra.mxu0 %v194
    %v333 = vpop.f32.mrf.mxu0
    %v334 = vadd.f32 %v314, %v333
    %335 = vdwg.mxu0
    %336 = vst [vmem:[#allocation7] sm:$0xff] %v334
    // Predicated region
    $region22: #{tpu_custom_call.1} parent=1 // pred_check
      _
    $region23: #{tpu_custom_call.1} parent=1 // pred_check_branch
      %338 = sbr.rel (0) target = $region25
    $region24: #{tpu_custom_call.1} parent=1 // pred_region
      %340 = vsyncadd [#allocation4], 96
      %s341 = sshll.u32 [#allocation7], 4
      %s342 = int_to_ptr.vmem [resolvable:$true] %s341
      %s343 = sshll.u32 %s3, 4
      %s344 = int_to_ptr.hbm [resolvable:$true] %s343
      %349 = dma.vmem_to_hbm [thread:$0]  %s342, 32, %s344, [#allocation4], 32, 32, 2
    $region25: #{tpu_custom_call.1} parent=1 // pred_fallthru
      _
    // Predicated region
    $region26: #{tpu_custom_call.1} parent=1 // pred_check
      _
    $region27: #{tpu_custom_call.1} parent=1 // pred_check_branch
      %351 = sbr.rel (0) target = $region29
    $region28: #{tpu_custom_call.1} parent=1 // pred_region
      %353 = dma.done [#allocation4], 128
    $region29: #{tpu_custom_call.1} parent=1 // pred_fallthru
      _
    %354 = vsyncpa [#allocation3], 1
    %355 = vsyncpa [#allocation6], 1
    %356 = vsyncpa [#allocation4], 1

</llo_original>
